<compile_context>
chip_gen: v5e
topology: v5e:2x2
jax: 0.10.0
libtpu: 0.0.40
codegen_flags: <defaults>
</compile_context>

<pallas_src>
import functools

import jax
import jax.numpy as jnp
from jax.experimental import pallas as pl
from jax.experimental.pallas import tpu as pltpu

LANE = 128
SUBLANE = 8


def _round_up(x, m):
    return ((x + m - 1) // m) * m


def _vmem_defaults():
    """(encoder-tile budget, scoped-VMEM limit) derived from the TPU generation."""
    try:
        kind = jax.devices()[0].device_kind.lower()
    except Exception:
        kind = ""
    if ("v7" in kind) or ("tpu7" in kind) or ("7x" in kind):
        # v7x: 64 MiB VMEM per TensorCore; each core carries its own buffers.
        return 28 << 20, 56 << 20
    if any(g in kind for g in ("v4", "v5", "v6")):
        # 128 MiB physical VMEM; default scoped limit is only 16-32 MiB, so the
        # explicit limit below is what unlocks the larger tiles.
        return 56 << 20, 104 << 20
    # Unknown hardware: stay conservative and do not override the scoped limit.
    return 8 << 20, None


def attn_decoder_kernel(hidden_ref, enc_ref, w_attn_ref, w_comb_ref, w_out_ref,
                        bias_ref, out_ref, attn_w_ref,
                        *, t_real, t_pad, h_pad, o_real, o_pad):
    # Small per-tile upcast of the bf16 hidden tile; weights stay resident f32.
    h = hidden_ref[...].astype(jnp.float32)                        # [tB, 2H]

    # Packed biases (f32): [ b_attn | b_comb | b_out ], each slice lane-aligned.
    # NOTE: keep biases in f32/bf16 -- the -1e30 pad would overflow in fp16.
    b_attn = bias_ref[:, 0:t_pad]                                   # [1, Tp]
    b_comb = bias_ref[:, t_pad:t_pad + h_pad]                       # [1, Hp]
    b_out = bias_ref[:, t_pad + h_pad:t_pad + h_pad + o_pad]        # [1, Op]

    # ---- attention logits + softmax over the (padded) time lanes -----------
    # Padded logit columns carry a -1e30 bias, so exp underflows to exactly 0
    # and the softmax over Tp lanes equals the softmax over the real T lanes.
    logits = jnp.dot(h, w_attn_ref[...],
                     preferred_element_type=jnp.float32) + b_attn   # [tB, Tp] f32
    m = jnp.max(logits, axis=-1, keepdims=True)
    e = jnp.exp(logits - m)
    denom = jnp.sum(e, axis=-1, keepdims=True)
    attn_w = e / denom                         # exact normalization (user-visible)
    attn_w_ref[...] = attn_w[:, :t_real].astype(attn_w_ref.dtype)   # real-width store

    # ---- attn_applied[b, :] = sum_t attn_w[b, t] * enc[b, t, :] -------------
    # Pure VPU broadcast-multiply + sublane reduce (no M=1 MXU matmul, no MXU
    # result-FIFO drains).  The softmax weights live with T on lanes; move
    # them to the sublane axis via a one-hot contraction (iota compare +
    # broadcast-mul + lane reduce): O(tB*T^2) VPU work, hidden under the
    # encoder DMA for realistic T.
    row = jax.lax.broadcasted_iota(jnp.int32, (t_real, t_real), 0)
    col = jax.lax.broadcasted_iota(jnp.int32, (t_real, t_real), 1)
    onehot = (row == col).astype(jnp.float32)                       # [T, T]
    aw3 = jnp.sum(attn_w[:, None, :t_real] * onehot,
                  axis=-1, keepdims=True)                           # [tB, T, 1] f32
    enc = enc_ref[...]                                              # [tB, T, 2H] (bf16)
    applied = jnp.sum(aw3 * enc, axis=1)                            # [tB, 2H] f32

    # ---- attn_combine + sigmoid ---------------------------------------------
    comb = jnp.dot(applied, w_comb_ref[...],
                   preferred_element_type=jnp.float32) + b_comb     # [tB, Hp] f32
    # sigmoid via EUP exp + EUP approx reciprocal (frees VALU slots).
    sig = pl.reciprocal(1.0 + jnp.exp(-comb), approx=True)          # [tB, Hp]
    # Padded H columns: comb == 0 -> sigmoid == 0.5, but the matching rows of
    # the zero-padded W_out contribute nothing to the output.

    # ---- output projection ---------------------------------------------------
    out = jnp.dot(sig, w_out_ref[...],
                  preferred_element_type=jnp.float32) + b_out       # [tB, Op] f32
    out_ref[...] = out[:, :o_real].astype(out_ref.dtype)            # real-width store


def init_params(key, hidden_size, output_size, max_length):
    """PyTorch Linear parameters, stored transposed ([in_features, out_features])."""
    twoH = 2 * hidden_size
    ks = jax.random.split(key, 6)
    scale = 0.1
    return {
        "w_attn": scale * jax.random.normal(ks[0], (twoH, max_length), jnp.float32),
        "b_attn": scale * jax.random.normal(ks[1], (1, max_length), jnp.float32),
        "w_comb": scale * jax.random.normal(ks[2], (twoH, hidden_size), jnp.float32),
        "b_comb": scale * jax.random.normal(ks[3], (1, hidden_size), jnp.float32),
        "w_out":  scale * jax.random.normal(ks[4], (hidden_size, output_size), jnp.float32),
        "b_out":  scale * jax.random.normal(ks[5], (1, output_size), jnp.float32),
    }


def pack_params(params):
    """Pad weight feature dims to lane multiples (128) and pack the 3 biases
    into one buffer.  Zero / -1e30 padding keeps the math exactly equivalent;
    done once outside the kernel (amortized over the decode loop)."""
    w_attn, b_attn = params["w_attn"], params["b_attn"]
    w_comb, b_comb = params["w_comb"], params["b_comb"]
    w_out, b_out = params["w_out"], params["b_out"]

    twoH, T = w_attn.shape
    H = w_comb.shape[1]
    O = w_out.shape[1]
    Tp, Hp, Op = (_round_up(d, LANE) for d in (T, H, O))
    dt = w_attn.dtype

    w_attn_p = jnp.zeros((twoH, Tp), dt).at[:, :T].set(w_attn)
    w_comb_p = jnp.zeros((twoH, Hp), dt).at[:, :H].set(w_comb)
    w_out_p = jnp.zeros((Hp, Op), dt).at[:H, :O].set(w_out)

    # Padded attention-logit columns get a huge negative bias -> softmax weight 0.
    b_attn_p = jnp.full((1, Tp), -1e30, dt).at[:, :T].set(b_attn)
    b_comb_p = jnp.zeros((1, Hp), dt).at[:, :H].set(b_comb)
    b_out_p = jnp.zeros((1, Op), dt).at[:, :O].set(b_out)
    bias_p = jnp.concatenate([b_attn_p, b_comb_p, b_out_p], axis=-1)   # [1, Tp+Hp+Op]

    return {"w_attn": w_attn_p, "w_comb": w_comb_p, "w_out": w_out_p,
            "bias": bias_p, "dims": (T, H, O)}


def attn_decoder_forward(hidden, encoder_outputs, packed, *, tile_b=None,
                         compute_dtype=jnp.bfloat16,
                         vmem_budget_bytes=None, vmem_limit_bytes=None):
    """hidden: [B, 2H]; encoder_outputs: [B, T, 2H]."""
    orig_hidden = hidden
    B, twoH = hidden.shape
    Be, T, twoHe = encoder_outputs.shape
    assert Be == B and twoHe == twoH
    T_, H, O = packed["dims"]
    assert T == T_, "encoder_outputs time dim must match max_length"
    Tp = packed["w_attn"].shape[1]
    Hp = packed["w_comb"].shape[1]
    Op = packed["w_out"].shape[1]

    # HBM-bandwidth bound on the encoder stream -> stream activations in bf16.
    # All in-kernel accumulation stays f32; outputs are produced in f32.
    if compute_dtype is not None and hidden.dtype != compute_dtype:
        hidden = hidden.astype(compute_dtype)
        encoder_outputs = encoder_outputs.astype(compute_dtype)

    in_bytes = jnp.dtype(hidden.dtype).itemsize
    # dtype-aware sublane packing: 8 for f32, 16 for bf16, 32 for int8.
    sub = max(SUBLANE, (SUBLANE * 4) // in_bytes)

    budget_default, limit_default = _vmem_defaults()
    if vmem_budget_bytes is None:
        vmem_budget_bytes = budget_default
    if vmem_limit_bytes is None:
        vmem_limit_bytes = limit_default

    # Bytes per batch row across every double-buffered block.
    per_row = (2 * T * twoH * in_bytes      # encoder tile (x2 buffers)
               + 2 * twoH * in_bytes        # hidden tile
               + 2 * O * 4                  # output tile (f32)
               + 2 * T * 4)                 # attn_weights tile (f32)
    # Resident weights + packed bias (x2: Pallas still allocates two buffers).
    weight_bytes = 2 * 4 * (twoH * Tp + twoH * Hp + Hp * Op + (Tp + Hp + Op))

    b_ceil = _round_up(B, sub)
    if tile_b is None:
        avail = max(vmem_budget_bytes - weight_bytes, per_row)
        tile_b = max(sub, (avail // per_row) // sub * sub)
        tile_b = min(tile_b, b_ceil)
        # v7x megacore: guarantee >= 2 grid steps so both TensorCores get work.
        if tile_b >= b_ceil:
            half = _round_up((b_ceil + 1) // 2, sub)
            if sub <= half < b_ceil:
                tile_b = half
    else:
        tile_b = min(_round_up(tile_b, sub), b_ceil)

    # Pad the batch to a whole number of tiles (sliced off after the call).
    Bp = _round_up(B, tile_b)
    if Bp != B:
        hidden = jnp.pad(hidden, ((0, Bp - B), (0, 0)))
        encoder_outputs = jnp.pad(encoder_outputs, ((0, Bp - B), (0, 0), (0, 0)))

    grid = (Bp // tile_b,)

    compiler_kwargs = dict(dimension_semantics=("parallel",))
    if vmem_limit_bytes is not None:
        needed = weight_bytes + tile_b * per_row + (4 << 20)
        compiler_kwargs["vmem_limit_bytes"] = int(
            min(vmem_limit_bytes, max(needed, 32 << 20)))

    kernel = functools.partial(attn_decoder_kernel, t_real=T, t_pad=Tp,
                               h_pad=Hp, o_real=O, o_pad=Op)

    out_p, attn_w_p = pl.pallas_call(
        kernel,
        grid=grid,
        in_specs=[
            pl.BlockSpec((tile_b, twoH), lambda i: (i, 0)),         # hidden tile
            pl.BlockSpec((tile_b, T, twoH), lambda i: (i, 0, 0)),   # encoder tile
            pl.BlockSpec((twoH, Tp), lambda i: (0, 0)),             # W_attn (resident)
            pl.BlockSpec((twoH, Hp), lambda i: (0, 0)),             # W_comb (resident)
            pl.BlockSpec((Hp, Op), lambda i: (0, 0)),               # W_out  (resident)
            pl.BlockSpec((1, Tp + Hp + Op), lambda i: (0, 0)),      # packed biases
        ],
        out_specs=(
            pl.BlockSpec((tile_b, O), lambda i: (i, 0)),            # real-width output
            pl.BlockSpec((tile_b, T), lambda i: (i, 0)),            # real-width attn_w
        ),
        out_shape=(
            jax.ShapeDtypeStruct((Bp, O), jnp.float32),
            jax.ShapeDtypeStruct((Bp, T), jnp.float32),
        ),
        compiler_params=pltpu.CompilerParams(**compiler_kwargs),
    )(hidden, encoder_outputs,
      packed["w_attn"], packed["w_comb"], packed["w_out"], packed["bias"])

    output = out_p[:B]
    attn_weights = attn_w_p[:B]
    # PyTorch returns hidden unchanged.
    return output, orig_hidden, attn_weights


def reference_forward(hidden, encoder_outputs, params):
    """Pure-JAX reference with the module's semantics."""
    logits = hidden @ params["w_attn"] + params["b_attn"]
    attn_w = jax.nn.softmax(logits, axis=-1)
    applied = jnp.einsum('bt,btd->bd', attn_w, encoder_outputs)
    comb = applied @ params["w_comb"] + params["b_comb"]
    out = jax.nn.sigmoid(comb) @ params["w_out"] + params["b_out"]
    return out, attn_w


if __name__ == "__main__":
    # Small shapes consistent with the module's forward pass.
    B = 32           # batch
    H = 32           # hidden_size
    T = 8            # max_length (number of encoder time steps)
    O = 16           # output_size

    key = jax.random.PRNGKey(0)
    k_hid, k_enc, k_par = jax.random.split(key, 3)

    hidden = jax.random.normal(k_hid, (B, 2 * H), jnp.float32)
    encoder_outputs = jax.random.normal(k_enc, (B, T, 2 * H), jnp.float32)
    params = init_params(k_par, H, O, T)
    packed = pack_params(params)

    # Auto tile_b -> batch split into 2 grid steps here (exercises pipelining,
    # resident weights and the v7x two-step guarantee).
    output, hidden_out, attn_weights = attn_decoder_forward(
        hidden, encoder_outputs, packed)
    jax.block_until_ready((output, hidden_out, attn_weights))

    assert output.shape == (B, O)
    assert hidden_out.shape == (B, 2 * H)
    assert attn_weights.shape == (B, T)

    # The kernel streams hidden / encoder_outputs in bf16; compare against the
    # f32 reference evaluated on the same bf16-rounded activations.
    hid_r = hidden.astype(jnp.bfloat16).astype(jnp.float32)
    enc_r = encoder_outputs.astype(jnp.bfloat16).astype(jnp.float32)
    ref_out, ref_attn = reference_forward(hid_r, enc_r, params)
    assert jnp.allclose(output, ref_out, atol=1e-2, rtol=1e-2)
    assert jnp.allclose(attn_weights, ref_attn, atol=1e-2, rtol=1e-2)
    assert jnp.allclose(hidden_out, hidden)

    print("KERNEL_OK")
</pallas_src>

<mosaic_0001>
module attributes {stable_mosaic.version = 11 : i64} {
  func.func @attn_decoder_kernel(%arg0: i32, %arg1: memref<16x64xbf16, #tpu.memory_space<vmem>>, %arg2: memref<16x8x64xbf16, #tpu.memory_space<vmem>>, %arg3: memref<64x128xf32, #tpu.memory_space<vmem>>, %arg4: memref<64x128xf32, #tpu.memory_space<vmem>>, %arg5: memref<128x128xf32, #tpu.memory_space<vmem>>, %arg6: memref<1x384xf32, #tpu.memory_space<vmem>>, %arg7: memref<16x16xf32, #tpu.memory_space<vmem>>, %arg8: memref<16x8xf32, #tpu.memory_space<vmem>>) attributes {dimension_semantics = [#tpu.dimension_semantics<parallel>], iteration_bounds = array<i64: 2>, scalar_prefetch = 0 : i64, scratch_operands = 0 : i64, tpu.core_type = #tpu.core_type<tc>, window_params = [{transform_indices = @transform_0, window_bounds = array<i64: 16, 64>}, {transform_indices = @transform_1, window_bounds = array<i64: 16, 8, 64>}, {pipeline_mode = #tpu.pipeline_mode<synchronous>, transform_indices = @transform_2, window_bounds = array<i64: 64, 128>}, {pipeline_mode = #tpu.pipeline_mode<synchronous>, transform_indices = @transform_3, window_bounds = array<i64: 64, 128>}, {pipeline_mode = #tpu.pipeline_mode<synchronous>, transform_indices = @transform_4, window_bounds = array<i64: 128, 128>}, {pipeline_mode = #tpu.pipeline_mode<synchronous>, transform_indices = @transform_5, window_bounds = array<i64: 1, 384>}, {transform_indices = @transform_6, window_bounds = array<i64: 16, 16>}, {transform_indices = @transform_7, window_bounds = array<i64: 16, 8>}]} {
    %c0 = arith.constant 0 : index
    %c0_0 = arith.constant 0 : index
    %0 = vector.load %arg1[%c0, %c0_0] : memref<16x64xbf16, #tpu.memory_space<vmem>>, vector<16x64xbf16>
    %1 = arith.extf %0 : vector<16x64xbf16> to vector<16x64xf32>
    %c0_1 = arith.constant 0 : index
    %c0_2 = arith.constant 0 : index
    %2 = vector.load %arg6[%c0_1, %c0_2] : memref<1x384xf32, #tpu.memory_space<vmem>>, vector<1x128xf32>
    %c0_3 = arith.constant 0 : index
    %c128 = arith.constant 128 : index
    %3 = vector.load %arg6[%c0_3, %c128] : memref<1x384xf32, #tpu.memory_space<vmem>>, vector<1x128xf32>
    %c0_4 = arith.constant 0 : index
    %c256 = arith.constant 256 : index
    %4 = vector.load %arg6[%c0_4, %c256] : memref<1x384xf32, #tpu.memory_space<vmem>>, vector<1x128xf32>
    %c0_5 = arith.constant 0 : index
    %c0_6 = arith.constant 0 : index
    %5 = vector.load %arg3[%c0_5, %c0_6] : memref<64x128xf32, #tpu.memory_space<vmem>>, vector<64x128xf32>
    %cst = arith.constant dense<0.000000e+00> : vector<16x128xf32>
    %6 = tpu.matmul %1, %5, %cst {dimension_numbers = #tpu.dot_dimension_numbers<[1], [0], [0], [1], [0, 0, 1, 1], [], []>} : vector<16x64xf32>, vector<64x128xf32>, vector<16x128xf32> -> vector<16x128xf32>
    %7 = vector.broadcast %2 : vector<1x128xf32> to vector<16x128xf32>
    %8 = arith.addf %6, %7 : vector<16x128xf32>
    %cst_7 = arith.constant dense<0xFF800000> : vector<16xf32>
    %9 = vector.multi_reduction <maximumf>, %8, %cst_7 [1] : vector<16x128xf32> to vector<16xf32>
    %10 = vector.shape_cast %9 : vector<16xf32> to vector<16x1xf32>
    %11 = vector.broadcast %10 : vector<16x1xf32> to vector<16x128xf32>
    %12 = arith.subf %8, %11 : vector<16x128xf32>
    %13 = math.exp %12 : vector<16x128xf32>
    %cst_8 = arith.constant dense<0.000000e+00> : vector<16xf32>
    %14 = vector.multi_reduction <add>, %13, %cst_8 [1] : vector<16x128xf32> to vector<16xf32>
    %15 = vector.shape_cast %14 : vector<16xf32> to vector<16x1xf32>
    %16 = vector.broadcast %15 : vector<16x1xf32> to vector<16x128xf32>
    %17 = arith.divf %13, %16 : vector<16x128xf32>
    %18 = vector.extract_strided_slice %17 {offsets = [0, 0], sizes = [16, 8], strides = [1, 1]} : vector<16x128xf32> to vector<16x8xf32>
    %c0_9 = arith.constant 0 : index
    %c0_10 = arith.constant 0 : index
    %19 = vector.load %arg8[%c0_9, %c0_10] : memref<16x8xf32, #tpu.memory_space<vmem>>, vector<16x8xf32>
    tpu.vector_store %arg8[%c0_9, %c0_10], %18 {strides = array<i32>} : memref<16x8xf32, #tpu.memory_space<vmem>>, vector<16x8xf32>,
    %20 = tpu.iota {dimensions = array<i32: 0>} : vector<8x8xi32>
    %21 = tpu.iota {dimensions = array<i32: 1>} : vector<8x8xi32>
    %22 = arith.cmpi eq, %20, %21 : vector<8x8xi32>
    %23 = arith.extui %22 : vector<8x8xi1> to vector<8x8xi32>
    %24 = arith.sitofp %23 : vector<8x8xi32> to vector<8x8xf32>
    %25 = vector.extract_strided_slice %17 {offsets = [0, 0], sizes = [16, 8], strides = [1, 1]} : vector<16x128xf32> to vector<16x8xf32>
    %26 = vector.shape_cast %25 : vector<16x8xf32> to vector<16x1x8xf32>
    %27 = vector.shape_cast %24 : vector<8x8xf32> to vector<1x8x8xf32>
    %28 = vector.broadcast %26 : vector<16x1x8xf32> to vector<16x8x8xf32>
    %29 = vector.broadcast %27 : vector<1x8x8xf32> to vector<16x8x8xf32>
    %30 = arith.mulf %28, %29 : vector<16x8x8xf32>
    %cst_11 = arith.constant dense<0.000000e+00> : vector<16x8xf32>
    %31 = vector.multi_reduction <add>, %30, %cst_11 [2] : vector<16x8x8xf32> to vector<16x8xf32>
    %32 = vector.shape_cast %31 : vector<16x8xf32> to vector<16x8x1xf32>
    %c0_12 = arith.constant 0 : index
    %c0_13 = arith.constant 0 : index
    %c0_14 = arith.constant 0 : index
    %33 = vector.load %arg2[%c0_12, %c0_13, %c0_14] : memref<16x8x64xbf16, #tpu.memory_space<vmem>>, vector<16x8x64xbf16>
    %34 = arith.extf %33 : vector<16x8x64xbf16> to vector<16x8x64xf32>
    %35 = vector.broadcast %32 : vector<16x8x1xf32> to vector<16x8x64xf32>
    %36 = arith.mulf %35, %34 : vector<16x8x64xf32>
    %cst_15 = arith.constant dense<0.000000e+00> : vector<16x64xf32>
    %37 = vector.multi_reduction <add>, %36, %cst_15 [1] : vector<16x8x64xf32> to vector<16x64xf32>
    %c0_16 = arith.constant 0 : index
    %c0_17 = arith.constant 0 : index
    %38 = vector.load %arg4[%c0_16, %c0_17] : memref<64x128xf32, #tpu.memory_space<vmem>>, vector<64x128xf32>
    %cst_18 = arith.constant dense<0.000000e+00> : vector<16x128xf32>
    %39 = tpu.matmul %37, %38, %cst_18 {dimension_numbers = #tpu.dot_dimension_numbers<[1], [0], [0], [1], [0, 0, 1, 1], [], []>} : vector<16x64xf32>, vector<64x128xf32>, vector<16x128xf32> -> vector<16x128xf32>
    %40 = vector.broadcast %3 : vector<1x128xf32> to vector<16x128xf32>
    %41 = arith.addf %39, %40 : vector<16x128xf32>
    %cst_19 = arith.constant 0.000000e+00 : f32
    %42 = vector.broadcast %cst_19 : f32 to vector<16x128xf32>
    %43 = arith.subf %42, %41 : vector<16x128xf32>
    %44 = math.exp %43 : vector<16x128xf32>
    %cst_20 = arith.constant 1.000000e+00 : f32
    %45 = vector.broadcast %cst_20 : f32 to vector<16x128xf32>
    %46 = arith.addf %45, %44 : vector<16x128xf32>
    %47 = tpu.reciprocal %46 {approx = true} : vector<16x128xf32> -> vector<16x128xf32>
    %c0_21 = arith.constant 0 : index
    %c0_22 = arith.constant 0 : index
    %48 = vector.load %arg5[%c0_21, %c0_22] : memref<128x128xf32, #tpu.memory_space<vmem>>, vector<128x128xf32>
    %cst_23 = arith.constant dense<0.000000e+00> : vector<16x128xf32>
    %49 = tpu.matmul %47, %48, %cst_23 {dimension_numbers = #tpu.dot_dimension_numbers<[1], [0], [0], [1], [0, 0, 1, 1], [], []>} : vector<16x128xf32>, vector<128x128xf32>, vector<16x128xf32> -> vector<16x128xf32>
    %50 = vector.broadcast %4 : vector<1x128xf32> to vector<16x128xf32>
    %51 = arith.addf %49, %50 : vector<16x128xf32>
    %52 = vector.extract_strided_slice %51 {offsets = [0, 0], sizes = [16, 16], strides = [1, 1]} : vector<16x128xf32> to vector<16x16xf32>
    %c0_24 = arith.constant 0 : index
    %c0_25 = arith.constant 0 : index
    %53 = vector.load %arg7[%c0_24, %c0_25] : memref<16x16xf32, #tpu.memory_space<vmem>>, vector<16x16xf32>
    tpu.vector_store %arg7[%c0_24, %c0_25], %52 {strides = array<i32>} : memref<16x16xf32, #tpu.memory_space<vmem>>, vector<16x16xf32>,
    return
  }
  func.func @transform_0(%arg0: i32) -> (i32, i32) {
    %c0_i32 = arith.constant 0 : i32
    %c0_i32_0 = arith.constant 0 : i32
    return %arg0, %c0_i32 : i32, i32
  }
  func.func @transform_1(%arg0: i32) -> (i32, i32, i32) {
    %c0_i32 = arith.constant 0 : i32
    %c0_i32_0 = arith.constant 0 : i32
    %c0_i32_1 = arith.constant 0 : i32
    return %arg0, %c0_i32, %c0_i32_0 : i32, i32, i32
  }
  func.func @transform_2(%arg0: i32) -> (i32, i32) {
    %c0_i32 = arith.constant 0 : i32
    %c0_i32_0 = arith.constant 0 : i32
    %c0_i32_1 = arith.constant 0 : i32
    return %c0_i32, %c0_i32_0 : i32, i32
  }
  func.func @transform_3(%arg0: i32) -> (i32, i32) {
    %c0_i32 = arith.constant 0 : i32
    %c0_i32_0 = arith.constant 0 : i32
    %c0_i32_1 = arith.constant 0 : i32
    return %c0_i32, %c0_i32_0 : i32, i32
  }
  func.func @transform_4(%arg0: i32) -> (i32, i32) {
    %c0_i32 = arith.constant 0 : i32
    %c0_i32_0 = arith.constant 0 : i32
    %c0_i32_1 = arith.constant 0 : i32
    return %c0_i32, %c0_i32_0 : i32, i32
  }
  func.func @transform_5(%arg0: i32) -> (i32, i32) {
    %c0_i32 = arith.constant 0 : i32
    %c0_i32_0 = arith.constant 0 : i32
    %c0_i32_1 = arith.constant 0 : i32
    return %c0_i32, %c0_i32_0 : i32, i32
  }
  func.func @transform_6(%arg0: i32) -> (i32, i32) {
    %c0_i32 = arith.constant 0 : i32
    %c0_i32_0 = arith.constant 0 : i32
    return %arg0, %c0_i32 : i32, i32
  }
  func.func @transform_7(%arg0: i32) -> (i32, i32) {
    %c0_i32 = arith.constant 0 : i32
    %c0_i32_0 = arith.constant 0 : i32
    return %arg0, %c0_i32 : i32, i32
  }
}

</mosaic_0001>

<llo_original>
// kernel: tpu_custom_call.1
$region0: #{tpu_custom_call.1}
  #allocation0 [shape = 'u32[]', space=smem, size = 0x4, offset = 0x4, fixed_abs, tag = 'smem constant byte address 0x4 - core index']
  #allocation1 [shape = 'u32[72,128]{1,0:T(1,128)}', space=vmem, size = 0x9000, scoped, tag = 'internal scratch']
  %s0 = inlined_call_operand.hbm [shape: bf16[32,64], index: 0, kind: input, shape index: {}]
  %s1 = inlined_call_operand.hbm [shape: bf16[32,8,64], index: 1, kind: input, shape index: {}]
  %s2 = inlined_call_operand.hbm [shape: f32[64,128], index: 2, kind: input, shape index: {}]
  %s3 = inlined_call_operand.hbm [shape: f32[64,128], index: 3, kind: input, shape index: {}]
  %s4 = inlined_call_operand.hbm [shape: f32[128,128], index: 4, kind: input, shape index: {}]
  %s5 = inlined_call_operand.vmem [shape: f32[1,384], index: 5, kind: input, shape index: {}]
  %s6 = inlined_call_operand.vmem [shape: f32[32,16], index: 6, kind: output, shape index: {0}]
  %s7 = inlined_call_operand.vmem [shape: f32[32,8], index: 7, kind: output, shape index: {1}]
  %8 = xla_tuple %s6, %s7
  %s9 = sld [smem:[#allocation0]]
  $region85: #{tpu_custom_call.1} parent=0
    _
  %s11 = ssub.s32 1, %s9
  %s12 = scalar_select 0, %s11, %s9
  $region1: #{tpu_custom_call.1} parent=0
    #allocation2 [shape = 'u8[8192]{0}', space=vmem, size = 0x2000, scoped, tag = 'input window, operand 0']
    #allocation3 [shape = 's32[2]{0}', space=sflag, size = 0x8, scoped, tag = 'scoped memory for tpu_custom_call.1']
    #allocation4 [shape = 'u8[65536]{0}', space=vmem, size = 0x10000, scoped, tag = 'input window, operand 1']
    #allocation5 [shape = 's32[2]{0}', space=sflag, size = 0x8, scoped, tag = 'scoped memory for tpu_custom_call.1']
    #allocation6 [shape = 'u8[32768]{0}', space=vmem, size = 0x8000, scoped, tag = 'input window, operand 2, single buffered']
    #allocation7 [shape = 'u8[32768]{0}', space=vmem, size = 0x8000, scoped, tag = 'input window, operand 3, single buffered']
    #allocation8 [shape = 's32[1]{0}', space=sflag, size = 0x4, scoped, tag = 'scoped memory for tpu_custom_call.1']
    #allocation9 [shape = 'u8[65536]{0}', space=vmem, size = 0x10000, scoped, tag = 'input window, operand 4, single buffered']
    %13 = vsyncpa [#allocation3], 0
    %s14 = scalar_lea.sflag [#allocation3], 1
    %15 = vsyncpa %s14, 0
    %16 = vsyncpa [#allocation5], 0
    %s17 = scalar_lea.sflag [#allocation5], 1
    %18 = vsyncpa %s17, 0
    %19 = vsyncpa [#allocation8], 0
    loop: start=0, step=1, limit=4
    $region2: #{tpu_custom_call.1} parent=1 // loop_pre_header
      _
    $region3: #{tpu_custom_call.1} parent=1 // loop_header
      %s21 = sphi 0, %s25
      %p22 = scmp.ge.s32.totalorder %s21, 4
      %s31 = sphi 0, %s33
      %s34 = sphi 0, %s31
      %s35 = sphi 0, %s34
      %s51 = sphi 0, %s35
      %s57 = sphi 0, %s59
      %s60 = sphi 0, %s57
      %s61 = sphi 0, %s60
      %s77 = sphi 0, %s61
      %s81 = sphi 0, %s81
      %s83 = sphi 0, %s81
      %s84 = sphi 0, %s83
      %s98 = sphi 0, %s84
      %s102 = sphi 0, %s102
      %s104 = sphi 0, %s102
      %s105 = sphi 0, %s104
      %s119 = sphi 0, %s105
      %s123 = sphi 0, %s123
      %s125 = sphi 0, %s123
      %s126 = sphi 0, %s125
      %s140 = sphi 0, %s126
      %s144 = sphi 0, %s144
      %s146 = sphi 0, %s144
      %s147 = sphi 0, %s146
      %s161 = sphi 0, %s147
      %s167 = sphi 0, %s169
      %s170 = sphi 0, %s167
      %s171 = sphi 0, %s170
      %s187 = sphi 0, %s171
      %s193 = sphi 0, %s195
      %s196 = sphi 0, %s193
      %s197 = sphi 0, %s196
      %s213 = sphi 0, %s197
    $region4: #{tpu_custom_call.1} parent=1 // loop_header_branch
      %24 = sbr.rel (%p22) target = $region8
    $region5: #{tpu_custom_call.1} parent=1 // loop_body
      %s26 = ssub.s32 %s21, 1
      %s27 = ssub.s32 %s21, 2
      %s28 = sadd.s32 %s21, 1
      %s29 = ssub.s32 %s21, %s28
      %p30 = scmp.eq.s32.totalorder %s29, 0
      %s32 = sadd.s32 %s31, 1
      %s33 = scalar_select %p30, %s31, %s32
      %p36 = pneg %p30
      %p37 = scmp.eq.s32.totalorder %s21, 1
      %p38 = por %p36, %p37
      %p39 = scmp.ne.s32.totalorder %s31, %s34
      %p40 = scmp.eq.s32.totalorder %s21, 0
      %p41 = por %p39, %p40
      %p42 = scmp.ne.s32.totalorder %s31, %s34
      %p43 = scmp.eq.s32.totalorder %s26, 1
      %p44 = por %p42, %p43
      %p45 = scmp.ne.s32.totalorder %s34, %s35
      %p46 = scmp.eq.s32.totalorder %s26, 0
      %p47 = por %p45, %p46
      %p48 = scmp.ne.s32.totalorder %s34, %s35
      %p49 = scmp.eq.s32.totalorder %s27, 1
      %p50 = por %p48, %p49
      %p52 = scmp.ne.s32.totalorder %s35, %s51
      %p53 = scmp.eq.s32.totalorder %s27, 0
      %p54 = por %p52, %p53
      %s55 = ssub.s32 %s21, %s28
      %p56 = scmp.eq.s32.totalorder %s55, 0
      %s58 = sadd.s32 %s57, 1
      %s59 = scalar_select %p56, %s57, %s58
      %p62 = pneg %p56
      %p63 = scmp.eq.s32.totalorder %s21, 1
      %p64 = por %p62, %p63
      %p65 = scmp.ne.s32.totalorder %s57, %s60
      %p66 = scmp.eq.s32.totalorder %s21, 0
      %p67 = por %p65, %p66
      %p68 = scmp.ne.s32.totalorder %s57, %s60
      %p69 = scmp.eq.s32.totalorder %s26, 1
      %p70 = por %p68, %p69
      %p71 = scmp.ne.s32.totalorder %s60, %s61
      %p72 = scmp.eq.s32.totalorder %s26, 0
      %p73 = por %p71, %p72
      %p74 = scmp.ne.s32.totalorder %s60, %s61
      %p75 = scmp.eq.s32.totalorder %s27, 1
      %p76 = por %p74, %p75
      %p78 = scmp.ne.s32.totalorder %s61, %s77
      %p79 = scmp.eq.s32.totalorder %s27, 0
      %p80 = por %p78, %p79
      %s82 = sadd.s32 %s81, 1
      %p85 = scmp.eq.s32.totalorder %s21, 1
      %p86 = scmp.ne.s32.totalorder %s81, %s83
      %p87 = scmp.eq.s32.totalorder %s21, 0
      %p88 = por %p86, %p87
      %p89 = scmp.ne.s32.totalorder %s81, %s83
      %p90 = scmp.eq.s32.totalorder %s26, 1
      %p91 = por %p89, %p90
      %p92 = scmp.ne.s32.totalorder %s83, %s84
      %p93 = scmp.eq.s32.totalorder %s26, 0
      %p94 = por %p92, %p93
      %p95 = scmp.ne.s32.totalorder %s83, %s84
      %p96 = scmp.eq.s32.totalorder %s27, 1
      %p97 = por %p95, %p96
      %p99 = scmp.ne.s32.totalorder %s84, %s98
      %p100 = scmp.eq.s32.totalorder %s27, 0
      %p101 = por %p99, %p100
      %s103 = sadd.s32 %s102, 1
      %p106 = scmp.eq.s32.totalorder %s21, 1
      %p107 = scmp.ne.s32.totalorder %s102, %s104
      %p108 = scmp.eq.s32.totalorder %s21, 0
      %p109 = por %p107, %p108
      %p110 = scmp.ne.s32.totalorder %s102, %s104
      %p111 = scmp.eq.s32.totalorder %s26, 1
      %p112 = por %p110, %p111
      %p113 = scmp.ne.s32.totalorder %s104, %s105
      %p114 = scmp.eq.s32.totalorder %s26, 0
      %p115 = por %p113, %p114
      %p116 = scmp.ne.s32.totalorder %s104, %s105
      %p117 = scmp.eq.s32.totalorder %s27, 1
      %p118 = por %p116, %p117
      %p120 = scmp.ne.s32.totalorder %s105, %s119
      %p121 = scmp.eq.s32.totalorder %s27, 0
      %p122 = por %p120, %p121
      %s124 = sadd.s32 %s123, 1
      %p127 = scmp.eq.s32.totalorder %s21, 1
      %p128 = scmp.ne.s32.totalorder %s123, %s125
      %p129 = scmp.eq.s32.totalorder %s21, 0
      %p130 = por %p128, %p129
      %p131 = scmp.ne.s32.totalorder %s123, %s125
      %p132 = scmp.eq.s32.totalorder %s26, 1
      %p133 = por %p131, %p132
      %p134 = scmp.ne.s32.totalorder %s125, %s126
      %p135 = scmp.eq.s32.totalorder %s26, 0
      %p136 = por %p134, %p135
      %p137 = scmp.ne.s32.totalorder %s125, %s126
      %p138 = scmp.eq.s32.totalorder %s27, 1
      %p139 = por %p137, %p138
      %p141 = scmp.ne.s32.totalorder %s126, %s140
      %p142 = scmp.eq.s32.totalorder %s27, 0
      %p143 = por %p141, %p142
      %s145 = sadd.s32 %s144, 1
      %p148 = scmp.eq.s32.totalorder %s21, 1
      %p149 = scmp.ne.s32.totalorder %s144, %s146
      %p150 = scmp.eq.s32.totalorder %s21, 0
      %p151 = por %p149, %p150
      %p152 = scmp.ne.s32.totalorder %s144, %s146
      %p153 = scmp.eq.s32.totalorder %s26, 1
      %p154 = por %p152, %p153
      %p155 = scmp.ne.s32.totalorder %s146, %s147
      %p156 = scmp.eq.s32.totalorder %s26, 0
      %p157 = por %p155, %p156
      %p158 = scmp.ne.s32.totalorder %s146, %s147
      %p159 = scmp.eq.s32.totalorder %s27, 1
      %p160 = por %p158, %p159
      %p162 = scmp.ne.s32.totalorder %s147, %s161
      %p163 = scmp.eq.s32.totalorder %s27, 0
      %p164 = por %p162, %p163
      %s165 = ssub.s32 %s21, %s28
      %p166 = scmp.eq.s32.totalorder %s165, 0
      %s168 = sadd.s32 %s167, 1
      %s169 = scalar_select %p166, %s167, %s168
      %p172 = pneg %p166
      %p173 = scmp.eq.s32.totalorder %s21, 1
      %p174 = por %p172, %p173
      %p175 = scmp.ne.s32.totalorder %s167, %s170
      %p176 = scmp.eq.s32.totalorder %s21, 0
      %p177 = por %p175, %p176
      %p178 = scmp.ne.s32.totalorder %s167, %s170
      %p179 = scmp.eq.s32.totalorder %s26, 1
      %p180 = por %p178, %p179
      %p181 = scmp.ne.s32.totalorder %s170, %s171
      %p182 = scmp.eq.s32.totalorder %s26, 0
      %p183 = por %p181, %p182
      %p184 = scmp.ne.s32.totalorder %s170, %s171
      %p185 = scmp.eq.s32.totalorder %s27, 1
      %p186 = por %p184, %p185
      %p188 = scmp.ne.s32.totalorder %s171, %s187
      %p189 = scmp.eq.s32.totalorder %s27, 0
      %p190 = por %p188, %p189
      %s191 = ssub.s32 %s21, %s28
      %p192 = scmp.eq.s32.totalorder %s191, 0
      %s194 = sadd.s32 %s193, 1
      %s195 = scalar_select %p192, %s193, %s194
      %p198 = pneg %p192
      %p199 = scmp.eq.s32.totalorder %s21, 1
      %p200 = por %p198, %p199
      %p201 = scmp.ne.s32.totalorder %s193, %s196
      %p202 = scmp.eq.s32.totalorder %s21, 0
      %p203 = por %p201, %p202
      %p204 = scmp.ne.s32.totalorder %s193, %s196
      %p205 = scmp.eq.s32.totalorder %s26, 1
      %p206 = por %p204, %p205
      %p207 = scmp.ne.s32.totalorder %s196, %s197
      %p208 = scmp.eq.s32.totalorder %s26, 0
      %p209 = por %p207, %p208
      %p210 = scmp.ne.s32.totalorder %s196, %s197
      %p211 = scmp.eq.s32.totalorder %s27, 1
      %p212 = por %p210, %p211
      %p214 = scmp.ne.s32.totalorder %s197, %s213
      %p215 = scmp.eq.s32.totalorder %s27, 0
      %p216 = por %p214, %p215
      %p217 = scmp.le.s32.totalorder 1, %s21
      %p218 = scmp.lt.s32.totalorder %s21, 3
      %p219 = pnand %p217, %p218
      %p220 = pneg %p219
      // Predicated region
      $region9: #{tpu_custom_call.1} parent=5 // pred_check
        _
      $region10: #{tpu_custom_call.1} parent=5 // pred_check_branch
        %222 = sbr.rel (%p219) target = $region12
      $region11: #{tpu_custom_call.1} parent=5 // pred_region
        %s223 = ssub.s32 %s21, 1
        // Predicated region
        $region13: #{tpu_custom_call.1} parent=11 // pred_check
          %p224 = pneg %p94
        $region14: #{tpu_custom_call.1} parent=11 // pred_check_branch
          %226 = sbr.rel (%p224) target = $region16
        $region15: #{tpu_custom_call.1} parent=11 // pred_region
          %228 = vsyncadd [#allocation5], 0
          %s229 = sshll.u32 %s2, 4
          %s230 = int_to_ptr.hbm [resolvable:$true] %s229
          %s231 = sshll.u32 [#allocation6], 4
          %s232 = int_to_ptr.vmem [resolvable:$true] %s231
          %237 = dma.hbm_to_vmem [thread:$0]  %s230, 1024, %s232, [#allocation5], 128, 128, 8
        $region16: #{tpu_custom_call.1} parent=11 // pred_fallthru
          _
        // Predicated region
        $region17: #{tpu_custom_call.1} parent=11 // pred_check
          %p238 = pneg %p115
        $region18: #{tpu_custom_call.1} parent=11 // pred_check_branch
          %240 = sbr.rel (%p238) target = $region20
        $region19: #{tpu_custom_call.1} parent=11 // pred_region
          %242 = vsyncadd [#allocation8], 0
          %s243 = sshll.u32 %s3, 4
          %s244 = int_to_ptr.hbm [resolvable:$true] %s243
          %s245 = sshll.u32 [#allocation7], 4
          %s246 = int_to_ptr.vmem [resolvable:$true] %s245
          %251 = dma.hbm_to_vmem [thread:$0]  %s244, 1024, %s246, [#allocation8], 128, 128, 8
        $region20: #{tpu_custom_call.1} parent=11 // pred_fallthru
          _
        // Predicated region
        $region21: #{tpu_custom_call.1} parent=11 // pred_check
          %p252 = pneg %p136
        $region22: #{tpu_custom_call.1} parent=11 // pred_check_branch
          %254 = sbr.rel (%p252) target = $region24
        $region23: #{tpu_custom_call.1} parent=11 // pred_region
          %256 = vsyncadd [#allocation8], 0
          %s257 = sshll.u32 %s4, 4
          %s258 = int_to_ptr.hbm [resolvable:$true] %s257
          %s259 = sshll.u32 [#allocation9], 4
          %s260 = int_to_ptr.vmem [resolvable:$true] %s259
          %265 = dma.hbm_to_vmem [thread:$0]  %s258, 2048, %s260, [#allocation8], 128, 128, 8
        $region24: #{tpu_custom_call.1} parent=11 // pred_fallthru
          _
        // Predicated region
        $region25: #{tpu_custom_call.1} parent=11 // pred_check
          %p266 = pneg %p157
        $region26: #{tpu_custom_call.1} parent=11 // pred_check_branch
          %268 = sbr.rel (%p266) target = $region28
        $region27: #{tpu_custom_call.1} parent=11 // pred_region
          _
        $region28: #{tpu_custom_call.1} parent=11 // pred_fallthru
          _
      $region12: #{tpu_custom_call.1} parent=5 // pred_fallthru
        _
      %p269 = scmp.lt.s32.totalorder %s21, 2
      // Predicated region
      $region29: #{tpu_custom_call.1} parent=5 // pred_check
        %p270 = pneg %p269
      $region30: #{tpu_custom_call.1} parent=5 // pred_check_branch
        %272 = sbr.rel (%p270) target = $region32
      $region31: #{tpu_custom_call.1} parent=5 // pred_region
        // Predicated region
        $region33: #{tpu_custom_call.1} parent=31 // pred_check
          %p273 = pneg %p41
        $region34: #{tpu_custom_call.1} parent=31 // pred_check_branch
          %275 = sbr.rel (%p273) target = $region36
        $region35: #{tpu_custom_call.1} parent=31 // pred_region
          %s276 = sand.u32 %s31, 1
          %s277 = scalar_lea.sflag [#allocation3], %s276
          %s278 = sand.u32 %s31, 1
          %s279 = smul.addr %s278, 8
          %s280 = scalar_lea.vmem [#allocation2], %s279
          %s281 = smul.u32 2, %s21
          %283 = vsyncadd %s277, 0
          %s284 = smul.addr %s281, 4
          %s285 = scalar_lea.hbm %s0, %s284
          %s286 = sshll.u32 %s285, 4
          %s287 = int_to_ptr.hbm [resolvable:$true] %s286
          %s288 = sshll.u32 %s280, 4
          %s289 = int_to_ptr.vmem [resolvable:$true] %s288
          %294 = dma.hbm_to_vmem [thread:$0]  %s287, 128, %s289, %s277, 64, 64, 4
        $region36: #{tpu_custom_call.1} parent=31 // pred_fallthru
          _
        // Predicated region
        $region37: #{tpu_custom_call.1} parent=31 // pred_check
          %p295 = pneg %p67
        $region38: #{tpu_custom_call.1} parent=31 // pred_check_branch
          %297 = sbr.rel (%p295) target = $region40
        $region39: #{tpu_custom_call.1} parent=31 // pred_region
          %s298 = sand.u32 %s21, 1
          %s299 = scalar_lea.sflag [#allocation5], %s298
          %s300 = sand.u32 %s57, 1
          %s301 = smul.addr %s300, 64
          %s302 = scalar_lea.vmem [#allocation4], %s301
          %s303 = smul.u32 16, %s21
          %305 = vsyncadd %s299, 0
          %s306 = smul.addr %s303, 4
          %s307 = scalar_lea.hbm %s1, %s306
          %s308 = sshll.u32 %s307, 4
          %s309 = int_to_ptr.hbm [resolvable:$true] %s308
          %s310 = sshll.u32 %s302, 4
          %s311 = int_to_ptr.vmem [resolvable:$true] %s310
          %316 = dma.hbm_to_vmem [thread:$0]  %s309, 1024, %s311, %s299, 64, 64, 4
        $region40: #{tpu_custom_call.1} parent=31 // pred_fallthru
          _
      $region32: #{tpu_custom_call.1} parent=5 // pred_fallthru
        _
      %p317 = scmp.le.s32.totalorder 1, %s21
      %p318 = scmp.lt.s32.totalorder %s21, 3
      %p319 = pnand %p317, %p318
      %p320 = pneg %p319
      // Predicated region
      $region41: #{tpu_custom_call.1} parent=5 // pred_check
        _
      $region42: #{tpu_custom_call.1} parent=5 // pred_check_branch
        %322 = sbr.rel (%p319) target = $region44
      $region43: #{tpu_custom_call.1} parent=5 // pred_region
        %s323 = ssub.s32 %s21, 1
        %s324 = sand.u32 %s34, 1
        %s325 = scalar_lea.sflag [#allocation3], %s324
        %s326 = sand.u32 %s34, 1
        %s327 = smul.addr %s326, 8
        %s328 = scalar_lea.vmem [#allocation2], %s327
        // Predicated region
        $region45: #{tpu_custom_call.1} parent=43 // pred_check
          %p329 = pneg %p47
        $region46: #{tpu_custom_call.1} parent=43 // pred_check_branch
          %331 = sbr.rel (%p329) target = $region48
        $region47: #{tpu_custom_call.1} parent=43 // pred_region
          %333 = dma.done %s325, 128
        $region48: #{tpu_custom_call.1} parent=43 // pred_fallthru
          _
        %s334 = sand.u32 %s26, 1
        %s335 = scalar_lea.sflag [#allocation5], %s334
        %s336 = sand.u32 %s60, 1
        %s337 = smul.addr %s336, 64
        %s338 = scalar_lea.vmem [#allocation4], %s337
        // Predicated region
        $region49: #{tpu_custom_call.1} parent=43 // pred_check
          %p339 = pneg %p73
        $region50: #{tpu_custom_call.1} parent=43 // pred_check_branch
          %341 = sbr.rel (%p339) target = $region52
        $region51: #{tpu_custom_call.1} parent=43 // pred_region
          %343 = dma.done %s335, 1024
        $region52: #{tpu_custom_call.1} parent=43 // pred_fallthru
          _
        // Predicated region
        $region53: #{tpu_custom_call.1} parent=43 // pred_check
          %p344 = pneg %p94
        $region54: #{tpu_custom_call.1} parent=43 // pred_check_branch
          %346 = sbr.rel (%p344) target = $region56
        $region55: #{tpu_custom_call.1} parent=43 // pred_region
          %348 = dma.done [#allocation5], 1024
        $region56: #{tpu_custom_call.1} parent=43 // pred_fallthru
          _
        // Predicated region
        $region57: #{tpu_custom_call.1} parent=43 // pred_check
          %p349 = pneg %p115
        $region58: #{tpu_custom_call.1} parent=43 // pred_check_branch
          %351 = sbr.rel (%p349) target = $region60
        $region59: #{tpu_custom_call.1} parent=43 // pred_region
          %353 = dma.done [#allocation8], 1024
        $region60: #{tpu_custom_call.1} parent=43 // pred_fallthru
          _
        // Predicated region
        $region61: #{tpu_custom_call.1} parent=43 // pred_check
          %p354 = pneg %p136
        $region62: #{tpu_custom_call.1} parent=43 // pred_check_branch
          %356 = sbr.rel (%p354) target = $region64
        $region63: #{tpu_custom_call.1} parent=43 // pred_region
          %358 = dma.done [#allocation8], 2048
        $region64: #{tpu_custom_call.1} parent=43 // pred_fallthru
          _
        %s359 = sand.u32 %s34, 1
        %s360 = scalar_lea.sflag [#allocation3], %s359
        %s361 = sand.u32 %s34, 1
        %s362 = smul.addr %s361, 8
        %s363 = scalar_lea.vmem [#allocation2], %s362
        %p364 = pneg %p47
        %p365 = pneg %p44
        %s366 = sand.u32 %s26, 1
        %s367 = scalar_lea.sflag [#allocation5], %s366
        %s368 = sand.u32 %s60, 1
        %s369 = smul.addr %s368, 64
        %s370 = scalar_lea.vmem [#allocation4], %s369
        %p371 = pneg %p73
        %p372 = pneg %p70
        %p373 = pneg %p94
        %p374 = pneg %p91
        %p375 = pneg %p115
        %p376 = pneg %p112
        %p377 = pneg %p136
        %p378 = pneg %p133
        %p379 = pneg %p157
        %p380 = pneg %p154
        %p381 = pneg %p183
        %p382 = pneg %p180
        %s383 = smul.u32 2, %s26
        %p384 = scmp.lt.s32.totalorder %s383, 3
        %s385 = scalar_select %p384, %s383, 3
        %s386 = smul.addr %s385, 8
        %s387 = scalar_lea.vmem %s6, %s386
        %p388 = pneg %p209
        %p389 = pneg %p206
        %s390 = smul.u32 2, %s26
        %p391 = scmp.lt.s32.totalorder %s390, 3
        %s392 = scalar_select %p391, %s390, 3
        %s393 = smul.addr %s392, 8
        %s394 = scalar_lea.vmem %s7, %s393
        %s395 = smul.u32 2, %s26
        %s396 = smul.u32 16, %s26
        %s397 = smul.u32 2, %s26
        %p398 = scmp.lt.s32.totalorder %s397, 3
        %s399 = scalar_select %p398, %s397, 3
        %s400 = smul.addr %s399, 8
        %s401 = scalar_lea.vmem %s6, %s400
        %s402 = smul.u32 2, %s26
        %s403 = smul.u32 2, %s26
        %p404 = scmp.lt.s32.totalorder %s403, 3
        %s405 = scalar_select %p404, %s403, 3
        %s406 = smul.addr %s405, 8
        %s407 = scalar_lea.vmem %s7, %s406
        %s408 = smul.u32 2, %s26
        %v409 = vld [vmem:[%s328] sm:$0xf]
        %v410 = vld [vmem:[%s328 + $0x4] sm:$0xf]
        %v411 = vunpack.c.l.bf16 %v409
        %v412 = vunpack.c.l.bf16 %v410
        %v413 = vld [vmem:[%s5] sm:$0x1]
        %v414 = vld [vmem:[%s5 + $0x1] sm:$0x1]
        %v415 = vld [vmem:[%s5 + $0x2] sm:$0x1]
        %v416 = vld [vmem:[#allocation6] sm:$0xff]
        %v417 = vld [vmem:[#allocation6 + $0x8] sm:$0xff]
        %v418 = vld [vmem:[#allocation6 + $0x10] sm:$0xff]
        %v419 = vld [vmem:[#allocation6 + $0x18] sm:$0xff]
        %v420 = vld [vmem:[#allocation6 + $0x20] sm:$0xff]
        %v421 = vld [vmem:[#allocation6 + $0x28] sm:$0xff]
        %v422 = vld [vmem:[#allocation6 + $0x30] sm:$0xff]
        %v423 = vld [vmem:[#allocation6 + $0x38] sm:$0xff]
        %v425 = vperm.slane %v413, 0
        %vm427 = vcmask 523264
        %v429 = vsel %vm427, %v411, 0
        %v432 = vsel %vm427, %v412, 0
        %434 = vmatpush.msra.mxu0 0.0
        %435 = vmatpush.msra.mxu0 0.0
        %436 = vmatpush.msra.mxu0 0.0
        %437 = vmatpush.msra.mxu0 0.0
        %438 = vmatpush.msra.mxu0 0.0
        %439 = vmatpush.msra.mxu0 0.0
        %440 = vmatpush.msra.mxu0 0.0
        %441 = vmatpush.msra.mxu0 0.0
        %442 = vmatpush.msra.mxu0 %v423
        %443 = vmatpush.msra.mxu0 %v422
        %444 = vmatpush.msra.mxu0 %v421
        %445 = vmatpush.msra.mxu0 %v420
        %446 = vmatpush.msra.mxu0 %v419
        %447 = vmatpush.msra.mxu0 %v418
        %448 = vmatpush.msra.mxu0 %v417
        %449 = vmatpush.msra.mxu0 %v416
        %450 = vmatmul.f32.gmra.mxu0 %v429
        %v451 = vpop.f32.mrf.mxu0
        %v452 = vadd.f32 %v425, %v451
        %453 = vmatmul.f32.gmra.mxu0 %v432
        %v454 = vpop.f32.mrf.mxu0
        %v455 = vadd.f32 %v425, %v454
        %456 = vdwg.mxu0
        %457 = vmax.xlane.f32.xlu0 %v452
        %v458 = vpop.xlane.xlu0 %457
        %459 = vmax.xlane.f32.xlu0 %v455
        %v460 = vpop.xlane.xlu0 %459
        %v461 = vsub.f32 %v452, %v458
        %v462 = vsub.f32 %v455, %v460
        %v463 = vmul.f32 %v461, 1.442695
        %v464 = vpow.pop %v463
        %v465 = vmul.f32 %v462, 1.442695
        %v466 = vpow.pop %v465
        %467 = vadd.xlane.f32.xlu0 %v464
        %v468 = vpop.xlane.xlu0 %467
        %469 = vadd.xlane.f32.xlu0 %v466
        %v470 = vpop.xlane.xlu0 %469
        %v471 = vrcp.pop %v468
        %v472 = vmul.f32 %v468, %v471
        %v473 = vsub.f32 1.0, %v472
        %v474 = vmul.f32 %v471, %v473
        %v475 = vadd.f32 %v471, %v474
        %vm476 = vweird.f32 %v468
        %vm477 = vweird.f32 %v471
        %vm478 = vmor %vm476, %vm477
        %v479 = vsel %vm478, %v471, %v475
        %v480 = vand.u32 2147483647, %v468
        %vm481 = vcmp.eq.f32.partialorder %v480, 8.507059e+37
        %v482 = vand.u32 %v468, 2147483648
        %v483 = vor.u32 1.1754944e-38, %v482
        %v484 = vsel %vm481, %v483, %v479
        %v485 = vmul.f32 %v464, %v484
        %v486 = vrcp.pop %v470
        %v487 = vmul.f32 %v470, %v486
        %v488 = vsub.f32 1.0, %v487
        %v489 = vmul.f32 %v486, %v488
        %v490 = vadd.f32 %v486, %v489
        %vm491 = vweird.f32 %v470
        %vm492 = vweird.f32 %v486
        %vm493 = vmor %vm491, %vm492
        %v494 = vsel %vm493, %v486, %v490
        %v495 = vand.u32 2147483647, %v470
        %vm496 = vcmp.eq.f32.partialorder %v495, 8.507059e+37
        %v497 = vand.u32 %v470, 2147483648
        %v498 = vor.u32 1.1754944e-38, %v497
        %v499 = vsel %vm496, %v498, %v494
        %v500 = vmul.f32 %v466, %v499
        %vm501 = vcmask 64512
        %502 = vst.msk [vmem:[%s407] sm:$0xff] %vm501, %v485
        %503 = vst.msk [vmem:[%s407 + $0x8] sm:$0xff] %vm501, %v500
        %v504 = vlaneseq
        %v505 = vshrl.u32 %v504, 7
        %v506 = vlaneseq
        %v507 = vand.u32 %v506, 127
        %vm508 = vcmp.eq.s32.totalorder %v505, %v507
        %v509 = vsel %vm508, 1, 0
        %v510 = vcvt.s32.f32 %v509
        %v513 = vrot.slane %v485, 1
        %v514 = vrot.slane %v485, 2
        %v515 = vrot.slane %v485, 3
        %v516 = vrot.slane %v485, 4
        %v517 = vrot.slane %v485, 5
        %v518 = vrot.slane %v485, 6
        %v519 = vrot.slane %v485, 7
        %v520 = vrot.slane %v500, 1
        %v521 = vrot.slane %v500, 2
        %v522 = vrot.slane %v500, 3
        %v523 = vrot.slane %v500, 4
        %v524 = vrot.slane %v500, 5
        %v525 = vrot.slane %v500, 6
        %v526 = vrot.slane %v500, 7
        %v527 = vperm.slane %v485, 0
        %v528 = vperm.slane %v513, 0
        %v529 = vperm.slane %v514, 0
        %v530 = vperm.slane %v515, 0
        %v531 = vperm.slane %v516, 0
        %v532 = vperm.slane %v517, 0
        %v533 = vperm.slane %v518, 0
        %v534 = vperm.slane %v519, 0
        %v535 = vperm.slane %v500, 0
        %v536 = vperm.slane %v520, 0
        %v537 = vperm.slane %v521, 0
        %v538 = vperm.slane %v522, 0
        %v539 = vperm.slane %v523, 0
        %v540 = vperm.slane %v524, 0
        %v541 = vperm.slane %v525, 0
        %v542 = vperm.slane %v526, 0
        %v559 = vmul.f32 %v527, %v510
        %v560 = vmul.f32 %v528, %v510
        %v561 = vmul.f32 %v529, %v510
        %v562 = vmul.f32 %v530, %v510
        %v563 = vmul.f32 %v531, %v510
        %v564 = vmul.f32 %v532, %v510
        %v565 = vmul.f32 %v533, %v510
        %v566 = vmul.f32 %v534, %v510
        %v567 = vmul.f32 %v535, %v510
        %v568 = vmul.f32 %v536, %v510
        %v569 = vmul.f32 %v537, %v510
        %v570 = vmul.f32 %v538, %v510
        %v571 = vmul.f32 %v539, %v510
        %v572 = vmul.f32 %v540, %v510
        %v573 = vmul.f32 %v541, %v510
        %v574 = vmul.f32 %v542, %v510
        %v575 = vsel %vm501, %v559, 0.0
        %576 = vadd.xlane.f32.xlu0 %v575
        %v577 = vpop.xlane.xlu0 %576
        %v578 = vsel %vm501, %v560, 0.0
        %579 = vadd.xlane.f32.xlu0 %v578
        %v580 = vpop.xlane.xlu0 %579
        %v581 = vsel %vm501, %v561, 0.0
        %582 = vadd.xlane.f32.xlu0 %v581
        %v583 = vpop.xlane.xlu0 %582
        %v584 = vsel %vm501, %v562, 0.0
        %585 = vadd.xlane.f32.xlu0 %v584
        %v586 = vpop.xlane.xlu0 %585
        %v587 = vsel %vm501, %v563, 0.0
        %588 = vadd.xlane.f32.xlu0 %v587
        %v589 = vpop.xlane.xlu0 %588
        %v590 = vsel %vm501, %v564, 0.0
        %591 = vadd.xlane.f32.xlu0 %v590
        %v592 = vpop.xlane.xlu0 %591
        %v593 = vsel %vm501, %v565, 0.0
        %594 = vadd.xlane.f32.xlu0 %v593
        %v595 = vpop.xlane.xlu0 %594
        %v596 = vsel %vm501, %v566, 0.0
        %597 = vadd.xlane.f32.xlu0 %v596
        %v598 = vpop.xlane.xlu0 %597
        %v599 = vsel %vm501, %v567, 0.0
        %600 = vadd.xlane.f32.xlu0 %v599
        %v601 = vpop.xlane.xlu0 %600
        %v602 = vsel %vm501, %v568, 0.0
        %603 = vadd.xlane.f32.xlu0 %v602
        %v604 = vpop.xlane.xlu0 %603
        %v605 = vsel %vm501, %v569, 0.0
        %606 = vadd.xlane.f32.xlu0 %v605
        %v607 = vpop.xlane.xlu0 %606
        %v608 = vsel %vm501, %v570, 0.0
        %609 = vadd.xlane.f32.xlu0 %v608
        %v610 = vpop.xlane.xlu0 %609
        %v611 = vsel %vm501, %v571, 0.0
        %612 = vadd.xlane.f32.xlu0 %v611
        %v613 = vpop.xlane.xlu0 %612
        %v614 = vsel %vm501, %v572, 0.0
        %615 = vadd.xlane.f32.xlu0 %v614
        %v616 = vpop.xlane.xlu0 %615
        %v617 = vsel %vm501, %v573, 0.0
        %618 = vadd.xlane.f32.xlu0 %v617
        %v619 = vpop.xlane.xlu0 %618
        %v620 = vsel %vm501, %v574, 0.0
        %621 = vadd.xlane.f32.xlu0 %v620
        %v622 = vpop.xlane.xlu0 %621
        %v623 = vld [vmem:[%s338] sm:$0xf]
        %v624 = vld [vmem:[%s338 + $0x4] sm:$0xf]
        %v625 = vld [vmem:[%s338 + $0x8] sm:$0xf]
        %v626 = vld [vmem:[%s338 + $0xc] sm:$0xf]
        %v627 = vld [vmem:[%s338 + $0x10] sm:$0xf]
        %v628 = vld [vmem:[%s338 + $0x14] sm:$0xf]
        %v629 = vld [vmem:[%s338 + $0x18] sm:$0xf]
        %v630 = vld [vmem:[%s338 + $0x1c] sm:$0xf]
        %v631 = vld [vmem:[%s338 + $0x20] sm:$0xf]
        %v632 = vld [vmem:[%s338 + $0x24] sm:$0xf]
        %v633 = vld [vmem:[%s338 + $0x28] sm:$0xf]
        %v634 = vld [vmem:[%s338 + $0x2c] sm:$0xf]
        %v635 = vld [vmem:[%s338 + $0x30] sm:$0xf]
        %v636 = vld [vmem:[%s338 + $0x34] sm:$0xf]
        %v637 = vld [vmem:[%s338 + $0x38] sm:$0xf]
        %v638 = vld [vmem:[%s338 + $0x3c] sm:$0xf]
        %v639 = vunpack.c.l.bf16 %v623
        %v640 = vunpack.c.l.bf16 %v624
        %v641 = vunpack.c.l.bf16 %v625
        %v642 = vunpack.c.l.bf16 %v626
        %v643 = vunpack.c.l.bf16 %v627
        %v644 = vunpack.c.l.bf16 %v628
        %v645 = vunpack.c.l.bf16 %v629
        %v646 = vunpack.c.l.bf16 %v630
        %v647 = vunpack.c.l.bf16 %v631
        %v648 = vunpack.c.l.bf16 %v632
        %v649 = vunpack.c.l.bf16 %v633
        %v650 = vunpack.c.l.bf16 %v634
        %v651 = vunpack.c.l.bf16 %v635
        %v652 = vunpack.c.l.bf16 %v636
        %v653 = vunpack.c.l.bf16 %v637
        %v654 = vunpack.c.l.bf16 %v638
        %v655 = vmul.f32 %v577, %v639
        %v656 = vmul.f32 %v580, %v640
        %v657 = vmul.f32 %v583, %v641
        %v658 = vmul.f32 %v586, %v642
        %v659 = vmul.f32 %v589, %v643
        %v660 = vmul.f32 %v592, %v644
        %v661 = vmul.f32 %v595, %v645
        %v662 = vmul.f32 %v598, %v646
        %v663 = vmul.f32 %v601, %v647
        %v664 = vmul.f32 %v604, %v648
        %v665 = vmul.f32 %v607, %v649
        %v666 = vmul.f32 %v610, %v650
        %v667 = vmul.f32 %v613, %v651
        %v668 = vmul.f32 %v616, %v652
        %v669 = vmul.f32 %v619, %v653
        %v670 = vmul.f32 %v622, %v654
        %v671 = vsel %vm427, %v655, 0.0
        %v672 = vrot.slane %v671, 4
        %v673 = vadd.f32 %v671, %v672
        %v674 = vrot.slane %v673, 2
        %v675 = vadd.f32 %v673, %v674
        %v676 = vrot.slane %v675, 1
        %v677 = vadd.f32 %v675, %v676
        %v678 = vsel %vm427, %v656, 0.0
        %v679 = vrot.slane %v678, 4
        %v680 = vadd.f32 %v678, %v679
        %v681 = vrot.slane %v680, 2
        %v682 = vadd.f32 %v680, %v681
        %v683 = vrot.slane %v682, 1
        %v684 = vadd.f32 %v682, %v683
        %v685 = vsel %vm427, %v657, 0.0
        %v686 = vrot.slane %v685, 4
        %v687 = vadd.f32 %v685, %v686
        %v688 = vrot.slane %v687, 2
        %v689 = vadd.f32 %v687, %v688
        %v690 = vrot.slane %v689, 1
        %v691 = vadd.f32 %v689, %v690
        %v692 = vsel %vm427, %v658, 0.0
        %v693 = vrot.slane %v692, 4
        %v694 = vadd.f32 %v692, %v693
        %v695 = vrot.slane %v694, 2
        %v696 = vadd.f32 %v694, %v695
        %v697 = vrot.slane %v696, 1
        %v698 = vadd.f32 %v696, %v697
        %v699 = vsel %vm427, %v659, 0.0
        %v700 = vrot.slane %v699, 4
        %v701 = vadd.f32 %v699, %v700
        %v702 = vrot.slane %v701, 2
        %v703 = vadd.f32 %v701, %v702
        %v704 = vrot.slane %v703, 1
        %v705 = vadd.f32 %v703, %v704
        %v706 = vsel %vm427, %v660, 0.0
        %v707 = vrot.slane %v706, 4
        %v708 = vadd.f32 %v706, %v707
        %v709 = vrot.slane %v708, 2
        %v710 = vadd.f32 %v708, %v709
        %v711 = vrot.slane %v710, 1
        %v712 = vadd.f32 %v710, %v711
        %v713 = vsel %vm427, %v661, 0.0
        %v714 = vrot.slane %v713, 4
        %v715 = vadd.f32 %v713, %v714
        %v716 = vrot.slane %v715, 2
        %v717 = vadd.f32 %v715, %v716
        %v718 = vrot.slane %v717, 1
        %v719 = vadd.f32 %v717, %v718
        %v720 = vsel %vm427, %v662, 0.0
        %v721 = vrot.slane %v720, 4
        %v722 = vadd.f32 %v720, %v721
        %v723 = vrot.slane %v722, 2
        %v724 = vadd.f32 %v722, %v723
        %v725 = vrot.slane %v724, 1
        %v726 = vadd.f32 %v724, %v725
        %v727 = vsel %vm427, %v663, 0.0
        %v728 = vrot.slane %v727, 4
        %v729 = vadd.f32 %v727, %v728
        %v730 = vrot.slane %v729, 2
        %v731 = vadd.f32 %v729, %v730
        %v732 = vrot.slane %v731, 1
        %v733 = vadd.f32 %v731, %v732
        %v734 = vsel %vm427, %v664, 0.0
        %v735 = vrot.slane %v734, 4
        %v736 = vadd.f32 %v734, %v735
        %v737 = vrot.slane %v736, 2
        %v738 = vadd.f32 %v736, %v737
        %v739 = vrot.slane %v738, 1
        %v740 = vadd.f32 %v738, %v739
        %v741 = vsel %vm427, %v665, 0.0
        %v742 = vrot.slane %v741, 4
        %v743 = vadd.f32 %v741, %v742
        %v744 = vrot.slane %v743, 2
        %v745 = vadd.f32 %v743, %v744
        %v746 = vrot.slane %v745, 1
        %v747 = vadd.f32 %v745, %v746
        %v748 = vsel %vm427, %v666, 0.0
        %v749 = vrot.slane %v748, 4
        %v750 = vadd.f32 %v748, %v749
        %v751 = vrot.slane %v750, 2
        %v752 = vadd.f32 %v750, %v751
        %v753 = vrot.slane %v752, 1
        %v754 = vadd.f32 %v752, %v753
        %v755 = vsel %vm427, %v667, 0.0
        %v756 = vrot.slane %v755, 4
        %v757 = vadd.f32 %v755, %v756
        %v758 = vrot.slane %v757, 2
        %v759 = vadd.f32 %v757, %v758
        %v760 = vrot.slane %v759, 1
        %v761 = vadd.f32 %v759, %v760
        %v762 = vsel %vm427, %v668, 0.0
        %v763 = vrot.slane %v762, 4
        %v764 = vadd.f32 %v762, %v763
        %v765 = vrot.slane %v764, 2
        %v766 = vadd.f32 %v764, %v765
        %v767 = vrot.slane %v766, 1
        %v768 = vadd.f32 %v766, %v767
        %v769 = vsel %vm427, %v669, 0.0
        %v770 = vrot.slane %v769, 4
        %v771 = vadd.f32 %v769, %v770
        %v772 = vrot.slane %v771, 2
        %v773 = vadd.f32 %v771, %v772
        %v774 = vrot.slane %v773, 1
        %v775 = vadd.f32 %v773, %v774
        %v776 = vsel %vm427, %v670, 0.0
        %v777 = vrot.slane %v776, 4
        %v778 = vadd.f32 %v776, %v777
        %v779 = vrot.slane %v778, 2
        %v780 = vadd.f32 %v778, %v779
        %v781 = vrot.slane %v780, 1
        %v782 = vadd.f32 %v780, %v781
        %v783 = vld [vmem:[#allocation7] sm:$0xff]
        %v784 = vld [vmem:[#allocation7 + $0x8] sm:$0xff]
        %v785 = vld [vmem:[#allocation7 + $0x10] sm:$0xff]
        %v786 = vld [vmem:[#allocation7 + $0x18] sm:$0xff]
        %v787 = vld [vmem:[#allocation7 + $0x20] sm:$0xff]
        %v788 = vld [vmem:[#allocation7 + $0x28] sm:$0xff]
        %v789 = vld [vmem:[#allocation7 + $0x30] sm:$0xff]
        %v790 = vld [vmem:[#allocation7 + $0x38] sm:$0xff]
        %v792 = vperm.slane %v414, 0
        %vm810 = vcmask 1041409
        %v811 = vsel %vm810, %v684, %v677
        %vm812 = vcmask 1042434
        %v813 = vsel %vm812, %v691, %v811
        %vm814 = vcmask 1043459
        %v815 = vsel %vm814, %v698, %v813
        %vm816 = vcmask 1044484
        %v817 = vsel %vm816, %v705, %v815
        %vm818 = vcmask 1045509
        %v819 = vsel %vm818, %v712, %v817
        %vm820 = vcmask 1046534
        %v821 = vsel %vm820, %v719, %v819
        %vm822 = vcmask 1047559
        %v823 = vsel %vm822, %v726, %v821
        %v824 = vsel %vm810, %v740, %v733
        %v825 = vsel %vm812, %v747, %v824
        %v826 = vsel %vm814, %v754, %v825
        %v827 = vsel %vm816, %v761, %v826
        %v828 = vsel %vm818, %v768, %v827
        %v829 = vsel %vm820, %v775, %v828
        %v830 = vsel %vm822, %v782, %v829
        %v831 = vsel %vm427, %v823, 0
        %v833 = vsel %vm427, %v830, 0
        %835 = vmatpush.msra.mxu0 0.0
        %836 = vmatpush.msra.mxu0 0.0
        %837 = vmatpush.msra.mxu0 0.0
        %838 = vmatpush.msra.mxu0 0.0
        %839 = vmatpush.msra.mxu0 0.0
        %840 = vmatpush.msra.mxu0 0.0
        %841 = vmatpush.msra.mxu0 0.0
        %842 = vmatpush.msra.mxu0 0.0
        %843 = vmatpush.msra.mxu0 %v790
        %844 = vmatpush.msra.mxu0 %v789
        %845 = vmatpush.msra.mxu0 %v788
        %846 = vmatpush.msra.mxu0 %v787
        %847 = vmatpush.msra.mxu0 %v786
        %848 = vmatpush.msra.mxu0 %v785
        %849 = vmatpush.msra.mxu0 %v784
        %850 = vmatpush.msra.mxu0 %v783
        %851 = vmatmul.f32.gmra.mxu0 %v831
        %v852 = vpop.f32.mrf.mxu0
        %v853 = vadd.f32 %v792, %v852
        %854 = vmatmul.f32.gmra.mxu0 %v833
        %v855 = vpop.f32.mrf.mxu0
        %v856 = vadd.f32 %v792, %v855
        %857 = vdwg.mxu0
        %v858 = vsub.f32 0.0, %v853
        %v859 = vsub.f32 0.0, %v856
        %v860 = vmul.f32 %v858, 1.442695
        %v861 = vpow.pop %v860
        %v862 = vmul.f32 %v859, 1.442695
        %v863 = vpow.pop %v862
        %v864 = vadd.f32 %v861, 1.0
        %v865 = vadd.f32 %v863, 1.0
        %v866 = vrcp.pop %v864
        %v867 = vrcp.pop %v865
        %v868 = vld [vmem:[#allocation9] sm:$0xff]
        %v869 = vld [vmem:[#allocation9 + $0x8] sm:$0xff]
        %v870 = vld [vmem:[#allocation9 + $0x10] sm:$0xff]
        %v871 = vld [vmem:[#allocation9 + $0x18] sm:$0xff]
        %v872 = vld [vmem:[#allocation9 + $0x20] sm:$0xff]
        %v873 = vld [vmem:[#allocation9 + $0x28] sm:$0xff]
        %v874 = vld [vmem:[#allocation9 + $0x30] sm:$0xff]
        %v875 = vld [vmem:[#allocation9 + $0x38] sm:$0xff]
        %v876 = vld [vmem:[#allocation9 + $0x40] sm:$0xff]
        %v877 = vld [vmem:[#allocation9 + $0x48] sm:$0xff]
        %v878 = vld [vmem:[#allocation9 + $0x50] sm:$0xff]
        %v879 = vld [vmem:[#allocation9 + $0x58] sm:$0xff]
        %v880 = vld [vmem:[#allocation9 + $0x60] sm:$0xff]
        %v881 = vld [vmem:[#allocation9 + $0x68] sm:$0xff]
        %v882 = vld [vmem:[#allocation9 + $0x70] sm:$0xff]
        %v883 = vld [vmem:[#allocation9 + $0x78] sm:$0xff]
        %v885 = vperm.slane %v415, 0
        %887 = vmatpush.msra.mxu0 %v883
        %888 = vmatpush.msra.mxu0 %v882
        %889 = vmatpush.msra.mxu0 %v881
        %890 = vmatpush.msra.mxu0 %v880
        %891 = vmatpush.msra.mxu0 %v879
        %892 = vmatpush.msra.mxu0 %v878
        %893 = vmatpush.msra.mxu0 %v877
        %894 = vmatpush.msra.mxu0 %v876
        %895 = vmatpush.msra.mxu0 %v875
        %896 = vmatpush.msra.mxu0 %v874
        %897 = vmatpush.msra.mxu0 %v873
        %898 = vmatpush.msra.mxu0 %v872
        %899 = vmatpush.msra.mxu0 %v871
        %900 = vmatpush.msra.mxu0 %v870
        %901 = vmatpush.msra.mxu0 %v869
        %902 = vmatpush.msra.mxu0 %v868
        %903 = vmatmul.f32.gmra.mxu0 %v866
        %v904 = vpop.f32.mrf.mxu0
        %v905 = vadd.f32 %v885, %v904
        %906 = vmatmul.f32.gmra.mxu0 %v867
        %v907 = vpop.f32.mrf.mxu0
        %v908 = vadd.f32 %v885, %v907
        %909 = vdwg.mxu0
        %vm910 = vcmask 130048
        %911 = vst.msk [vmem:[%s401] sm:$0xff] %vm910, %v905
        %912 = vst.msk [vmem:[%s401 + $0x8] sm:$0xff] %vm910, %v908
        %s913 = smul.u32 2, %s26
        %p914 = scmp.lt.s32.totalorder %s913, 3
        %s915 = scalar_select %p914, %s913, 3
        %s916 = smul.addr %s915, 8
        %s917 = scalar_lea.vmem %s6, %s916
        %s918 = smul.u32 2, %s26
        %p919 = scmp.lt.s32.totalorder %s918, 3
        %s920 = scalar_select %p919, %s918, 3
        %s921 = smul.addr %s920, 8
        %s922 = scalar_lea.vmem %s7, %s921
        // Predicated region
        $region65: #{tpu_custom_call.1} parent=43 // pred_check
          %p923 = pneg %p180
        $region66: #{tpu_custom_call.1} parent=43 // pred_check_branch
          %925 = sbr.rel (%p923) target = $region68
        $region67: #{tpu_custom_call.1} parent=43 // pred_region
          %s926 = smul.u32 2, %s26
        $region68: #{tpu_custom_call.1} parent=43 // pred_fallthru
          _
        // Predicated region
        $region69: #{tpu_custom_call.1} parent=43 // pred_check
          %p927 = pneg %p206
        $region70: #{tpu_custom_call.1} parent=43 // pred_check_branch
          %929 = sbr.rel (%p927) target = $region72
        $region71: #{tpu_custom_call.1} parent=43 // pred_region
          %s930 = smul.u32 2, %s26
        $region72: #{tpu_custom_call.1} parent=43 // pred_fallthru
          _
      $region44: #{tpu_custom_call.1} parent=5 // pred_fallthru
        _
      %p931 = scmp.le.s32.totalorder 2, %s21
      // Predicated region
      $region73: #{tpu_custom_call.1} parent=5 // pred_check
        %p932 = pneg %p931
      $region74: #{tpu_custom_call.1} parent=5 // pred_check_branch
        %934 = sbr.rel (%p932) target = $region76
      $region75: #{tpu_custom_call.1} parent=5 // pred_region
        %s935 = ssub.s32 %s21, 2
        // Predicated region
        $region77: #{tpu_custom_call.1} parent=75 // pred_check
          %p936 = pneg %p186
        $region78: #{tpu_custom_call.1} parent=75 // pred_check_branch
          %938 = sbr.rel (%p936) target = $region80
        $region79: #{tpu_custom_call.1} parent=75 // pred_region
          %s939 = smul.u32 2, %s27
          %p940 = scmp.lt.s32.totalorder %s939, 3
          %s941 = scalar_select %p940, %s939, 3
          %s942 = smul.addr %s941, 8
          %s943 = scalar_lea.vmem %s6, %s942
        $region80: #{tpu_custom_call.1} parent=75 // pred_fallthru
          _
        // Predicated region
        $region81: #{tpu_custom_call.1} parent=75 // pred_check
          %p944 = pneg %p212
        $region82: #{tpu_custom_call.1} parent=75 // pred_check_branch
          %946 = sbr.rel (%p944) target = $region84
        $region83: #{tpu_custom_call.1} parent=75 // pred_region
          %s947 = smul.u32 2, %s27
          %p948 = scmp.lt.s32.totalorder %s947, 3
          %s949 = scalar_select %p948, %s947, 3
          %s950 = smul.addr %s949, 8
          %s951 = scalar_lea.vmem %s7, %s950
        $region84: #{tpu_custom_call.1} parent=75 // pred_fallthru
          _
      $region76: #{tpu_custom_call.1} parent=5 // pred_fallthru
        _
    $region6: #{tpu_custom_call.1} parent=1 // loop_footer
      %s25 = sadd.s32 1, %s21
    $region7: #{tpu_custom_call.1} parent=1 // loop_footer_branch
      %20 = sbr.rel target = $region3
    $region8: #{tpu_custom_call.1} parent=1 // loop_exit
      _
    %952 = vsyncpa [#allocation3], 1
    %s953 = scalar_lea.sflag [#allocation3], 1
    %954 = vsyncpa %s953, 1
    %955 = vsyncpa [#allocation5], 1
    %s956 = scalar_lea.sflag [#allocation5], 1
    %957 = vsyncpa %s956, 1
    %958 = vsyncpa [#allocation8], 1

</llo_original>
